<compile_context>
chip_gen: v6e
topology: v6e:2x2x1
jax: 0.10.0
libtpu: 0.0.40
codegen_flags: <defaults>
</compile_context>

<pallas_src>
import functools

import jax
import jax.numpy as jnp
from jax.experimental import pallas as pl
from jax.experimental.pallas import tpu as pltpu


# ---------------------------------------------------------------------------
# Kernels
# ---------------------------------------------------------------------------
def _se_single_pass_kernel(x_ref, w1_ref, b1_ref, w2_ref, b2_ref, o_ref, *, bt, hw):
    """Fused squeeze -> excite -> scale for one (bt, C, HW) block.

    bt == 1 : w2_ref is (C, Ch) output-major, b2_ref is (C, 1)   [VPU/XLU excite]
    bt >= 2 : w2_ref is (Ch, C) pre-transposed, b2_ref is (1, C) [MXU excite]
    """
    inv_hw = 1.0 / hw
    if bt == 1:
        x = x_ref[0]                                                        # (C, HW)
        s = jnp.sum(x, axis=1, keepdims=True, dtype=jnp.float32) * inv_hw   # (C, 1)
        h = jnp.sum(w1_ref[...] * s, axis=0, keepdims=True) + b1_ref[...]   # (1, Ch)
        h = h * jax.nn.sigmoid(h)                                           # SiLU
        g = jnp.sum(w2_ref[...] * h, axis=1, keepdims=True) + b2_ref[...]   # (C, 1)
        g = jax.nn.sigmoid(g)
        o_ref[0] = x * g.astype(x.dtype)
    else:
        x = x_ref[...]                                                      # (bt, C, HW)
        s = jnp.sum(x, axis=-1, dtype=jnp.float32) * inv_hw                 # (bt, C)
        h = jnp.dot(s, w1_ref[...], preferred_element_type=jnp.float32) + b1_ref[...]
        h = h * jax.nn.sigmoid(h)                                           # (bt, Ch)
        g = jnp.dot(h, w2_ref[...], preferred_element_type=jnp.float32) + b2_ref[...]
        g = jax.nn.sigmoid(g)                                               # (bt, C)
        o_ref[...] = x * g[:, :, None].astype(x.dtype)


def _se_squeeze_excite_kernel(x_ref, w1_ref, b1_ref, w2_ref, b2_ref, gate_ref, *, hw, thw):
    """Two-pass fallback, pass 1: HW-tiled mean, excite on the last HW tile."""
    t = pl.program_id(1)

    @pl.when(t == 0)
    def _():
        gate_ref[...] = jnp.zeros_like(gate_ref)

    x = x_ref[0]                                                            # (C, thw)
    if hw % thw:                                                            # ragged last tile
        lane = jax.lax.broadcasted_iota(jnp.int32, x.shape, 1)
        x = jnp.where(t * thw + lane < hw, x, 0)
    gate_ref[...] += jnp.sum(x, axis=1, keepdims=True, dtype=jnp.float32)[None]

    @pl.when(t == pl.num_programs(1) - 1)
    def _():
        s = gate_ref[0] * (1.0 / hw)                                        # (C, 1)
        h = jnp.sum(w1_ref[...] * s, axis=0, keepdims=True) + b1_ref[...]   # (1, Ch)
        h = h * jax.nn.sigmoid(h)                                           # SiLU
        g = jnp.sum(w2_ref[...] * h, axis=1, keepdims=True) + b2_ref[...]   # (C, 1)
        gate_ref[0] = jax.nn.sigmoid(g)


def _se_scale_kernel(x_ref, gate_ref, o_ref):
    """Two-pass fallback, pass 2: HW-tiled broadcast-scale."""
    x = x_ref[0]                                                            # (C, thw)
    g = gate_ref[0]                                                         # (C, 1) f32
    o_ref[0] = x * g.astype(x.dtype)


# ---------------------------------------------------------------------------
# Wrapper
# ---------------------------------------------------------------------------
def se_unit(x_nchw, w1, b1, w2, b2, *, force_two_pass=False, hw_tile=None):
    """SE forward on NCHW input.

    x_nchw: (N, C, H, W)
    w1: (C, Ch)  (= fc1.weight[:, :, 0, 0].T)    b1: (Ch,)
    w2: (C, Ch)  (= fc2.weight[:, :, 0, 0])      b2: (C,)
    """
    N, C, H, W = x_nchw.shape
    HW = H * W
    Ch = w1.shape[1]
    x = x_nchw.reshape(N, C, HW)                 # free reshape of contiguous NCHW
    dtype = x.dtype
    itemsize = dtype.itemsize
    w_itemsize = jnp.dtype(w1.dtype).itemsize

    # --- per-generation VMEM budget ---------------------------------------
    try:
        vmem_phys = int(pltpu.get_tpu_info().vmem_capacity_bytes)
    except Exception:
        vmem_phys = 64 << 20                     # conservative: smallest (v7x) VMEM
    vmem_cap = max(int(vmem_phys * 0.85), 32 << 20)

    weight_bytes = (2 * C * Ch + C + Ch) * w_itemsize
    headroom = 4 << 20
    img_bytes = C * HW * itemsize
    avail = max(vmem_cap - 2 * weight_bytes - headroom, 0)
    max_bt = avail // (4 * img_bytes)            # in + out, double-buffered
    use_single_pass = (max_bt >= 1) and not force_two_pass

    flops = N * (2 * C * HW + 4 * C * Ch)
    transcendentals = N * (C + 2 * Ch)
    w1_2d = w1.reshape(C, Ch)
    b1_2d = b1.reshape(1, Ch)

    def run(single_buffer_weights):
        # Weights never change across grid steps -> single VMEM copy.
        wkw = {"pipeline_mode": pl.Buffered(1)} if single_buffer_weights else {}

        if use_single_pass:
            # ---- fused single pass, batch-tiled -----------------------------
            target_block = 4 << 20               # ~4 MiB x-block per step
            bt = int(min(N, max_bt, max(1, target_block // img_bytes)))
            while N % bt:                        # no ragged batch blocks
                bt -= 1
            if bt == 1:
                w2_arr, b2_arr = w2.reshape(C, Ch), b2.reshape(C, 1)
            else:
                w2_arr, b2_arr = w2.reshape(C, Ch).T, b2.reshape(1, C)

            vmem_limit = int(min(max(4 * bt * img_bytes + 2 * weight_bytes + headroom,
                                     32 << 20), vmem_cap))
            cost = pl.CostEstimate(flops=flops, transcendentals=transcendentals,
                                   bytes_accessed=2 * N * img_bytes + weight_bytes)
            return pl.pallas_call(
                functools.partial(_se_single_pass_kernel, bt=bt, hw=HW),
                out_shape=jax.ShapeDtypeStruct((N, C, HW), dtype),
                grid_spec=pltpu.PrefetchScalarGridSpec(
                    num_scalar_prefetch=0,
                    grid=(N // bt,),
                    in_specs=[
                        pl.BlockSpec((bt, C, HW), lambda n: (n, 0, 0)),
                        pl.BlockSpec(w1_2d.shape, lambda n: (0, 0), **wkw),
                        pl.BlockSpec(b1_2d.shape, lambda n: (0, 0), **wkw),
                        pl.BlockSpec(w2_arr.shape, lambda n: (0, 0), **wkw),
                        pl.BlockSpec(b2_arr.shape, lambda n: (0, 0), **wkw),
                    ],
                    out_specs=pl.BlockSpec((bt, C, HW), lambda n: (n, 0, 0)),
                ),
                compiler_params=pltpu.CompilerParams(
                    dimension_semantics=("parallel",),
                    vmem_limit_bytes=vmem_limit,
                ),
                cost_estimate=cost,
            )(x, w1_2d, b1_2d, w2_arr, b2_arr)

        # ---- two-pass fallback: HW-tiled squeeze+excite, then HW-tiled scale --
        w2_cc, b2_c1 = w2.reshape(C, Ch), b2.reshape(C, 1)
        if hw_tile is not None:
            thw = max(128, (int(hw_tile) // 128) * 128)
        else:
            tgt = min(4 << 20, max(avail // 8, 1 << 20))
            thw = max(128, (int(tgt // (C * itemsize)) // 128) * 128)
        thw = min(thw, ((HW + 127) // 128) * 128)
        n_t = -(-HW // thw)                      # cdiv

        tile_bytes = C * thw * itemsize
        vmem_p1 = int(min(max(4 * tile_bytes + 2 * weight_bytes + headroom, 32 << 20), vmem_cap))
        vmem_p2 = int(min(max(8 * tile_bytes + headroom, 32 << 20), vmem_cap))

        gates = pl.pallas_call(
            functools.partial(_se_squeeze_excite_kernel, hw=HW, thw=thw),
            out_shape=jax.ShapeDtypeStruct((N, C, 1), jnp.float32),
            grid_spec=pltpu.PrefetchScalarGridSpec(
                num_scalar_prefetch=0,
                grid=(N, n_t),
                in_specs=[
                    pl.BlockSpec((1, C, thw), lambda n, t: (n, 0, t)),
                    pl.BlockSpec((C, Ch), lambda n, t: (0, 0), **wkw),
                    pl.BlockSpec((1, Ch), lambda n, t: (0, 0), **wkw),
                    pl.BlockSpec((C, Ch), lambda n, t: (0, 0), **wkw),
                    pl.BlockSpec((C, 1), lambda n, t: (0, 0), **wkw),
                ],
                out_specs=pl.BlockSpec((1, C, 1), lambda n, t: (n, 0, 0)),
            ),
            compiler_params=pltpu.CompilerParams(
                dimension_semantics=("parallel", "arbitrary"),
                vmem_limit_bytes=vmem_p1,
            ),
            cost_estimate=pl.CostEstimate(
                flops=N * (C * HW + 4 * C * Ch), transcendentals=transcendentals,
                bytes_accessed=N * img_bytes + weight_bytes + N * C * 4),
        )(x, w1_2d, b1_2d, w2_cc, b2_c1)

        return pl.pallas_call(
            _se_scale_kernel,
            out_shape=jax.ShapeDtypeStruct((N, C, HW), dtype),
            grid_spec=pltpu.PrefetchScalarGridSpec(
                num_scalar_prefetch=0,
                grid=(N, n_t),
                in_specs=[
                    pl.BlockSpec((1, C, thw), lambda n, t: (n, 0, t)),
                    pl.BlockSpec((1, C, 1), lambda n, t: (n, 0, 0)),
                ],
                out_specs=pl.BlockSpec((1, C, thw), lambda n, t: (n, 0, t)),
            ),
            compiler_params=pltpu.CompilerParams(
                dimension_semantics=("parallel", "parallel"),
                vmem_limit_bytes=vmem_p2,
            ),
            cost_estimate=pl.CostEstimate(
                flops=N * C * HW, transcendentals=0,
                bytes_accessed=2 * N * img_bytes + N * C * 4),
        )(x, gates)

    try:
        out = run(single_buffer_weights=True)
    except Exception:
        # Version-compat guard: some Pallas versions reject pipeline_mode=
        # Buffered(1) on pallas_call operands; retry with default buffering
        # (costs a little extra VMEM for the constant weight operands).
        out = run(single_buffer_weights=False)
    return out.reshape(N, C, H, W)


def se_unit_ref(x, w1, b1, w2, b2):
    """Pure-JAX reference matching the PyTorch forward (NCHW)."""
    s = jnp.mean(x, axis=(2, 3))                                  # (N, C)
    h = s @ w1 + b1.reshape(1, -1)                                # (N, Ch)
    h = h * jax.nn.sigmoid(h)                                     # SiLU
    g = jax.nn.sigmoid(h @ w2.T + b2.reshape(1, -1))              # (N, C)
    return x * g[:, :, None, None]


if __name__ == "__main__":
    def make_inputs(key, N, C, H, W, r=4):
        Ch = max(C // r, 1)
        kx, k1, k2, k3, k4 = jax.random.split(key, 5)
        x = jax.random.normal(kx, (N, C, H, W), dtype=jnp.float32)
        w1 = 0.1 * jax.random.normal(k1, (C, Ch), dtype=jnp.float32)
        b1 = 0.1 * jax.random.normal(k2, (Ch,), dtype=jnp.float32)
        w2 = 0.1 * jax.random.normal(k3, (C, Ch), dtype=jnp.float32)
        b2 = 0.1 * jax.random.normal(k4, (C,), dtype=jnp.float32)
        return x, w1, b1, w2, b2

    k0, k1, k2 = jax.random.split(jax.random.PRNGKey(0), 3)

    # 1) single-pass, batch-tiled (Bt = 2), MXU excite path
    args = make_inputs(k0, 2, 8, 16, 16)
    out = jax.block_until_ready(se_unit(*args))
    ref = se_unit_ref(*args)
    assert out.shape == args[0].shape
    assert jnp.allclose(out, ref, atol=1e-5, rtol=1e-5), "single-pass (Bt=2) mismatch"

    # 2) single-pass, Bt == 1 (per-image VPU/XLU excite path)
    args = make_inputs(k1, 1, 8, 16, 16)
    out = jax.block_until_ready(se_unit(*args))
    ref = se_unit_ref(*args)
    assert jnp.allclose(out, ref, atol=1e-5, rtol=1e-5), "single-pass (Bt=1) mismatch"

    # 3) two-pass fallback, forced, with ragged HW tiles (HW=400, tile=128)
    args = make_inputs(k2, 2, 8, 20, 20)
    out = jax.block_until_ready(se_unit(*args, force_two_pass=True, hw_tile=128))
    ref = se_unit_ref(*args)
    assert jnp.allclose(out, ref, atol=1e-5, rtol=1e-5), "two-pass fallback mismatch"

    print("KERNEL_OK")
</pallas_src>

<mosaic_0001>
module attributes {stable_mosaic.version = 11 : i64} {
  func.func @_se_single_pass_kernel(%arg0: i32, %arg1: memref<2x8x256xf32, #tpu.memory_space<vmem>>, %arg2: memref<8x2xf32, #tpu.memory_space<vmem>>, %arg3: memref<1x2xf32, #tpu.memory_space<vmem>>, %arg4: memref<2x8xf32, #tpu.memory_space<vmem>>, %arg5: memref<1x8xf32, #tpu.memory_space<vmem>>, %arg6: memref<2x8x256xf32, #tpu.memory_space<vmem>>) attributes {dimension_semantics = [#tpu.dimension_semantics<parallel>], iteration_bounds = array<i64: 1>, scalar_prefetch = 0 : i64, scratch_operands = 0 : i64, tpu.core_type = #tpu.core_type<tc>, window_params = [{transform_indices = @transform_0, window_bounds = array<i64: 2, 8, 256>}, {pipeline_mode = #tpu.pipeline_mode<synchronous>, transform_indices = @transform_1, window_bounds = array<i64: 8, 2>}, {pipeline_mode = #tpu.pipeline_mode<synchronous>, transform_indices = @transform_2, window_bounds = array<i64: 1, 2>}, {pipeline_mode = #tpu.pipeline_mode<synchronous>, transform_indices = @transform_3, window_bounds = array<i64: 2, 8>}, {pipeline_mode = #tpu.pipeline_mode<synchronous>, transform_indices = @transform_4, window_bounds = array<i64: 1, 8>}, {transform_indices = @transform_5, window_bounds = array<i64: 2, 8, 256>}]} {
    %c0 = arith.constant 0 : index
    %c0_0 = arith.constant 0 : index
    %c0_1 = arith.constant 0 : index
    %0 = vector.load %arg1[%c0, %c0_0, %c0_1] : memref<2x8x256xf32, #tpu.memory_space<vmem>>, vector<2x8x256xf32>
    %cst = arith.constant dense<0.000000e+00> : vector<2x8xf32>
    %1 = vector.multi_reduction <add>, %0, %cst [2] : vector<2x8x256xf32> to vector<2x8xf32>
    %cst_2 = arith.constant 3.906250e-03 : f32
    %2 = vector.broadcast %cst_2 : f32 to vector<2x8xf32>
    %3 = arith.mulf %1, %2 : vector<2x8xf32>
    %c0_3 = arith.constant 0 : index
    %c0_4 = arith.constant 0 : index
    %4 = vector.load %arg2[%c0_3, %c0_4] : memref<8x2xf32, #tpu.memory_space<vmem>>, vector<8x2xf32>
    %cst_5 = arith.constant dense<0.000000e+00> : vector<2x2xf32>
    %5 = tpu.matmul %3, %4, %cst_5 {dimension_numbers = #tpu.dot_dimension_numbers<[1], [0], [0], [1], [0, 0, 1, 1], [], []>} : vector<2x8xf32>, vector<8x2xf32>, vector<2x2xf32> -> vector<2x2xf32>
    %c0_6 = arith.constant 0 : index
    %c0_7 = arith.constant 0 : index
    %6 = vector.load %arg3[%c0_6, %c0_7] : memref<1x2xf32, #tpu.memory_space<vmem>>, vector<1x2xf32>
    %7 = vector.broadcast %6 : vector<1x2xf32> to vector<2x2xf32>
    %8 = arith.addf %5, %7 : vector<2x2xf32>
    %9 = arith.negf %8 : vector<2x2xf32>
    %10 = math.exp %9 : vector<2x2xf32>
    %cst_8 = arith.constant 1.000000e+00 : f32
    %11 = vector.broadcast %cst_8 : f32 to vector<2x2xf32>
    %12 = arith.addf %11, %10 : vector<2x2xf32>
    %13 = arith.divf %11, %12 : vector<2x2xf32>
    %14 = arith.mulf %8, %13 : vector<2x2xf32>
    %c0_9 = arith.constant 0 : index
    %c0_10 = arith.constant 0 : index
    %15 = vector.load %arg4[%c0_9, %c0_10] : memref<2x8xf32, #tpu.memory_space<vmem>>, vector<2x8xf32>
    %cst_11 = arith.constant dense<0.000000e+00> : vector<2x8xf32>
    %16 = tpu.matmul %14, %15, %cst_11 {dimension_numbers = #tpu.dot_dimension_numbers<[1], [0], [0], [1], [0, 0, 1, 1], [], []>} : vector<2x2xf32>, vector<2x8xf32>, vector<2x8xf32> -> vector<2x8xf32>
    %c0_12 = arith.constant 0 : index
    %c0_13 = arith.constant 0 : index
    %17 = vector.load %arg5[%c0_12, %c0_13] : memref<1x8xf32, #tpu.memory_space<vmem>>, vector<1x8xf32>
    %18 = vector.broadcast %17 : vector<1x8xf32> to vector<2x8xf32>
    %19 = arith.addf %16, %18 : vector<2x8xf32>
    %20 = arith.negf %19 : vector<2x8xf32>
    %21 = math.exp %20 : vector<2x8xf32>
    %cst_14 = arith.constant 1.000000e+00 : f32
    %22 = vector.broadcast %cst_14 : f32 to vector<2x8xf32>
    %23 = arith.addf %22, %21 : vector<2x8xf32>
    %24 = arith.divf %22, %23 : vector<2x8xf32>
    %25 = vector.shape_cast %24 : vector<2x8xf32> to vector<2x8x1xf32>
    %26 = vector.broadcast %25 : vector<2x8x1xf32> to vector<2x8x256xf32>
    %27 = arith.mulf %0, %26 : vector<2x8x256xf32>
    %c0_15 = arith.constant 0 : index
    %c0_16 = arith.constant 0 : index
    %c0_17 = arith.constant 0 : index
    %28 = vector.load %arg6[%c0_15, %c0_16, %c0_17] : memref<2x8x256xf32, #tpu.memory_space<vmem>>, vector<2x8x256xf32>
    tpu.vector_store %arg6[%c0_15, %c0_16, %c0_17], %27 {strides = array<i32>} : memref<2x8x256xf32, #tpu.memory_space<vmem>>, vector<2x8x256xf32>,
    return
  }
  func.func @transform_0(%arg0: i32) -> (i32, i32, i32) {
    %c0_i32 = arith.constant 0 : i32
    %c0_i32_0 = arith.constant 0 : i32
    %c0_i32_1 = arith.constant 0 : i32
    return %arg0, %c0_i32, %c0_i32_0 : i32, i32, i32
  }
  func.func @transform_1(%arg0: i32) -> (i32, i32) {
    %c0_i32 = arith.constant 0 : i32
    %c0_i32_0 = arith.constant 0 : i32
    %c0_i32_1 = arith.constant 0 : i32
    return %c0_i32, %c0_i32_0 : i32, i32
  }
  func.func @transform_2(%arg0: i32) -> (i32, i32) {
    %c0_i32 = arith.constant 0 : i32
    %c0_i32_0 = arith.constant 0 : i32
    %c0_i32_1 = arith.constant 0 : i32
    return %c0_i32, %c0_i32_0 : i32, i32
  }
  func.func @transform_3(%arg0: i32) -> (i32, i32) {
    %c0_i32 = arith.constant 0 : i32
    %c0_i32_0 = arith.constant 0 : i32
    %c0_i32_1 = arith.constant 0 : i32
    return %c0_i32, %c0_i32_0 : i32, i32
  }
  func.func @transform_4(%arg0: i32) -> (i32, i32) {
    %c0_i32 = arith.constant 0 : i32
    %c0_i32_0 = arith.constant 0 : i32
    %c0_i32_1 = arith.constant 0 : i32
    return %c0_i32, %c0_i32_0 : i32, i32
  }
  func.func @transform_5(%arg0: i32) -> (i32, i32, i32) {
    %c0_i32 = arith.constant 0 : i32
    %c0_i32_0 = arith.constant 0 : i32
    %c0_i32_1 = arith.constant 0 : i32
    return %arg0, %c0_i32, %c0_i32_0 : i32, i32, i32
  }
}

module attributes {stable_mosaic.version = 11 : i64} {
  func.func @_se_single_pass_kernel(%arg0: i32, %arg1: memref<2x8x256xf32, #tpu.memory_space<vmem>>, %arg2: memref<8x2xf32, #tpu.memory_space<vmem>>, %arg3: memref<1x2xf32, #tpu.memory_space<vmem>>, %arg4: memref<2x8xf32, #tpu.memory_space<vmem>>, %arg5: memref<1x8xf32, #tpu.memory_space<vmem>>, %arg6: memref<2x8x256xf32, #tpu.memory_space<vmem>>) attributes {dimension_semantics = [#tpu.dimension_semantics<parallel>], iteration_bounds = array<i64: 1>, scalar_prefetch = 0 : i64, scratch_operands = 0 : i64, tpu.core_type = #tpu.core_type<tc>, window_params = [{transform_indices = @transform_0, window_bounds = array<i64: 2, 8, 256>}, {pipeline_mode = #tpu.pipeline_mode<synchronous>, transform_indices = @transform_1, window_bounds = array<i64: 8, 2>}, {pipeline_mode = #tpu.pipeline_mode<synchronous>, transform_indices = @transform_2, window_bounds = array<i64: 1, 2>}, {pipeline_mode = #tpu.pipeline_mode<synchronous>, transform_indices = @transform_3, window_bounds = array<i64: 2, 8>}, {pipeline_mode = #tpu.pipeline_mode<synchronous>, transform_indices = @transform_4, window_bounds = array<i64: 1, 8>}, {transform_indices = @transform_5, window_bounds = array<i64: 2, 8, 256>}]} {
    %c0 = arith.constant 0 : index
    %c0_0 = arith.constant 0 : index
    %c0_1 = arith.constant 0 : index
    %0 = vector.load %arg1[%c0, %c0_0, %c0_1] : memref<2x8x256xf32, #tpu.memory_space<vmem>>, vector<2x8x256xf32>
    %cst = arith.constant dense<0.000000e+00> : vector<2x8xf32>
    %1 = vector.multi_reduction <add>, %0, %cst [2] : vector<2x8x256xf32> to vector<2x8xf32>
    %cst_2 = arith.constant 3.906250e-03 : f32
    %2 = vector.broadcast %cst_2 : f32 to vector<2x8xf32>
    %3 = arith.mulf %1, %2 : vector<2x8xf32>
    %c0_3 = arith.constant 0 : index
    %c0_4 = arith.constant 0 : index
    %4 = vector.load %arg2[%c0_3, %c0_4] : memref<8x2xf32, #tpu.memory_space<vmem>>, vector<8x2xf32>
    %cst_5 = arith.constant dense<0.000000e+00> : vector<2x2xf32>
    %5 = tpu.matmul %3, %4, %cst_5 {dimension_numbers = #tpu.dot_dimension_numbers<[1], [0], [0], [1], [0, 0, 1, 1], [], []>} : vector<2x8xf32>, vector<8x2xf32>, vector<2x2xf32> -> vector<2x2xf32>
    %c0_6 = arith.constant 0 : index
    %c0_7 = arith.constant 0 : index
    %6 = vector.load %arg3[%c0_6, %c0_7] : memref<1x2xf32, #tpu.memory_space<vmem>>, vector<1x2xf32>
    %7 = vector.broadcast %6 : vector<1x2xf32> to vector<2x2xf32>
    %8 = arith.addf %5, %7 : vector<2x2xf32>
    %9 = arith.negf %8 : vector<2x2xf32>
    %10 = math.exp %9 : vector<2x2xf32>
    %cst_8 = arith.constant 1.000000e+00 : f32
    %11 = vector.broadcast %cst_8 : f32 to vector<2x2xf32>
    %12 = arith.addf %11, %10 : vector<2x2xf32>
    %13 = arith.divf %11, %12 : vector<2x2xf32>
    %14 = arith.mulf %8, %13 : vector<2x2xf32>
    %c0_9 = arith.constant 0 : index
    %c0_10 = arith.constant 0 : index
    %15 = vector.load %arg4[%c0_9, %c0_10] : memref<2x8xf32, #tpu.memory_space<vmem>>, vector<2x8xf32>
    %cst_11 = arith.constant dense<0.000000e+00> : vector<2x8xf32>
    %16 = tpu.matmul %14, %15, %cst_11 {dimension_numbers = #tpu.dot_dimension_numbers<[1], [0], [0], [1], [0, 0, 1, 1], [], []>} : vector<2x2xf32>, vector<2x8xf32>, vector<2x8xf32> -> vector<2x8xf32>
    %c0_12 = arith.constant 0 : index
    %c0_13 = arith.constant 0 : index
    %17 = vector.load %arg5[%c0_12, %c0_13] : memref<1x8xf32, #tpu.memory_space<vmem>>, vector<1x8xf32>
    %18 = vector.broadcast %17 : vector<1x8xf32> to vector<2x8xf32>
    %19 = arith.addf %16, %18 : vector<2x8xf32>
    %20 = arith.negf %19 : vector<2x8xf32>
    %21 = math.exp %20 : vector<2x8xf32>
    %cst_14 = arith.constant 1.000000e+00 : f32
    %22 = vector.broadcast %cst_14 : f32 to vector<2x8xf32>
    %23 = arith.addf %22, %21 : vector<2x8xf32>
    %24 = arith.divf %22, %23 : vector<2x8xf32>
    %25 = vector.shape_cast %24 : vector<2x8xf32> to vector<2x8x1xf32>
    %26 = vector.broadcast %25 : vector<2x8x1xf32> to vector<2x8x256xf32>
    %27 = arith.mulf %0, %26 : vector<2x8x256xf32>
    %c0_15 = arith.constant 0 : index
    %c0_16 = arith.constant 0 : index
    %c0_17 = arith.constant 0 : index
    %28 = vector.load %arg6[%c0_15, %c0_16, %c0_17] : memref<2x8x256xf32, #tpu.memory_space<vmem>>, vector<2x8x256xf32>
    tpu.vector_store %arg6[%c0_15, %c0_16, %c0_17], %27 {strides = array<i32>} : memref<2x8x256xf32, #tpu.memory_space<vmem>>, vector<2x8x256xf32>,
    return
  }
  func.func @transform_0(%arg0: i32) -> (i32, i32, i32) {
    %c0_i32 = arith.constant 0 : i32
    %c0_i32_0 = arith.constant 0 : i32
    %c0_i32_1 = arith.constant 0 : i32
    return %arg0, %c0_i32, %c0_i32_0 : i32, i32, i32
  }
  func.func @transform_1(%arg0: i32) -> (i32, i32) {
    %c0_i32 = arith.constant 0 : i32
    %c0_i32_0 = arith.constant 0 : i32
    %c0_i32_1 = arith.constant 0 : i32
    return %c0_i32, %c0_i32_0 : i32, i32
  }
  func.func @transform_2(%arg0: i32) -> (i32, i32) {
    %c0_i32 = arith.constant 0 : i32
    %c0_i32_0 = arith.constant 0 : i32
    %c0_i32_1 = arith.constant 0 : i32
    return %c0_i32, %c0_i32_0 : i32, i32
  }
  func.func @transform_3(%arg0: i32) -> (i32, i32) {
    %c0_i32 = arith.constant 0 : i32
    %c0_i32_0 = arith.constant 0 : i32
    %c0_i32_1 = arith.constant 0 : i32
    return %c0_i32, %c0_i32_0 : i32, i32
  }
  func.func @transform_4(%arg0: i32) -> (i32, i32) {
    %c0_i32 = arith.constant 0 : i32
    %c0_i32_0 = arith.constant 0 : i32
    %c0_i32_1 = arith.constant 0 : i32
    return %c0_i32, %c0_i32_0 : i32, i32
  }
  func.func @transform_5(%arg0: i32) -> (i32, i32, i32) {
    %c0_i32 = arith.constant 0 : i32
    %c0_i32_0 = arith.constant 0 : i32
    %c0_i32_1 = arith.constant 0 : i32
    return %arg0, %c0_i32, %c0_i32_0 : i32, i32, i32
  }
}

</mosaic_0001>

<llo_original>
// kernel: tpu_custom_call.1
$region0: #{tpu_custom_call.1}
  #allocation0 [shape = 'u32[]', space=smem, size = 0x4, offset = 0x4, fixed_abs, tag = 'smem constant byte address 0x4 - core index']
  #allocation1 [shape = 'u32[144,128]{1,0:T(1,128)}', space=vmem, size = 0x12000, scoped, tag = 'internal scratch']
  %s0 = inlined_call_operand.hbm [shape: f32[2,8,256], index: 0, kind: input, shape index: {}]
  %s1 = inlined_call_operand.vmem [shape: f32[8,2], index: 1, kind: input, shape index: {}]
  %s2 = inlined_call_operand.vmem [shape: f32[1,2], index: 2, kind: input, shape index: {}]
  %s3 = inlined_call_operand.vmem [shape: f32[2,8], index: 3, kind: input, shape index: {}]
  %s4 = inlined_call_operand.vmem [shape: f32[1,8], index: 4, kind: input, shape index: {}]
  %s5 = inlined_call_operand.hbm [shape: f32[2,8,256], index: 5, kind: output, shape index: {}]
  %s6 = sld [smem:[#allocation0]]
  $region34: #{tpu_custom_call.1} parent=0
    _
  %s8 = ssub.s32 1, %s6
  %s9 = scalar_select 0, %s8, %s6
  $region1: #{tpu_custom_call.1} parent=0
    #allocation2 [shape = 'u8[16384]{0}', space=vmem, size = 0x4000, scoped, tag = 'input window, operand 0, single buffered']
    #allocation3 [shape = 's32[1]{0}', space=sflag, size = 0x4, scoped, tag = 'scoped memory for tpu_custom_call.1']
    #allocation4 [shape = 's32[1]{0}', space=sflag, size = 0x4, scoped, tag = 'scoped memory for tpu_custom_call.1']
    #allocation5 [shape = 'u8[16384]{0}', space=vmem, size = 0x4000, scoped, tag = 'output window, operand 0, single buffered']
    %10 = vsyncpa [#allocation3], 0
    %11 = vsyncpa [#allocation4], 0
    // Predicated region
    $region2: #{tpu_custom_call.1} parent=1 // pred_check
      _
    $region3: #{tpu_custom_call.1} parent=1 // pred_check_branch
      %13 = sbr.rel (0) target = $region5
    $region4: #{tpu_custom_call.1} parent=1 // pred_region
      %s15 = ssub.s32 512, 512
      %16 = vsyncadd [#allocation3], %s15
      %s17 = sshll.u32 [#allocation2], 4
      %s18 = int_to_ptr.vmem [resolvable:$true] %s17
      %23 = dma.hbm_to_vmem [thread:$0]  %s0, 512, %s18, [#allocation3], 256, 256, 16
    $region5: #{tpu_custom_call.1} parent=1 // pred_fallthru
      _
    // Predicated region
    $region6: #{tpu_custom_call.1} parent=1 // pred_check
      _
    $region7: #{tpu_custom_call.1} parent=1 // pred_check_branch
      %25 = sbr.rel (0) target = $region9
    $region8: #{tpu_custom_call.1} parent=1 // pred_region
      _
    $region9: #{tpu_custom_call.1} parent=1 // pred_fallthru
      _
    // Predicated region
    $region10: #{tpu_custom_call.1} parent=1 // pred_check
      _
    $region11: #{tpu_custom_call.1} parent=1 // pred_check_branch
      %27 = sbr.rel (0) target = $region13
    $region12: #{tpu_custom_call.1} parent=1 // pred_region
      _
    $region13: #{tpu_custom_call.1} parent=1 // pred_fallthru
      _
    // Predicated region
    $region14: #{tpu_custom_call.1} parent=1 // pred_check
      _
    $region15: #{tpu_custom_call.1} parent=1 // pred_check_branch
      %29 = sbr.rel (0) target = $region17
    $region16: #{tpu_custom_call.1} parent=1 // pred_region
      _
    $region17: #{tpu_custom_call.1} parent=1 // pred_fallthru
      _
    // Predicated region
    $region18: #{tpu_custom_call.1} parent=1 // pred_check
      _
    $region19: #{tpu_custom_call.1} parent=1 // pred_check_branch
      %31 = sbr.rel (0) target = $region21
    $region20: #{tpu_custom_call.1} parent=1 // pred_region
      _
    $region21: #{tpu_custom_call.1} parent=1 // pred_fallthru
      _
    // Predicated region
    $region22: #{tpu_custom_call.1} parent=1 // pred_check
      _
    $region23: #{tpu_custom_call.1} parent=1 // pred_check_branch
      %33 = sbr.rel (0) target = $region25
    $region24: #{tpu_custom_call.1} parent=1 // pred_region
      %34 = dma.done [#allocation3], 512
    $region25: #{tpu_custom_call.1} parent=1 // pred_fallthru
      _
    %v35 = vld [vmem:[#allocation2] sm:$0xff]
    %v36 = vld [vmem:[#allocation2 + $0x8] sm:$0xff]
    %v37 = vld [vmem:[#allocation2 + $0x10] sm:$0xff]
    %v38 = vld [vmem:[#allocation2 + $0x18] sm:$0xff]
    %v39 = vadd.f32 %v35, %v36
    %40 = vadd.xlane.f32.xlu0 %v39
    %v41 = vpop.xlane.xlu0 %40
    %v42 = vadd.f32 %v37, %v38
    %43 = vadd.xlane.f32.xlu0 %v42
    %v44 = vpop.xlane.xlu0 %43
    %v45 = vmul.f32 %v41, 0.00390625
    %v46 = vmul.f32 %v44, 0.00390625
    %v47 = vld [vmem:[%s1] sm:$0xff]
    %v48 = vld [vmem:[%s2] sm:$0x1]
    %v50 = vlaneseq
    %v51 = vshrl.u32 %v50, 7
    %v52 = vsub.s32 0, %v51
    %v53 = vrot.slane %v48, %v52
    %v57 = vlaneseq
    %v58 = vand.u32 %v57, 127
    %v59 = vlaneseq
    %v60 = vshrl.u32 %v59, 7
    %v61 = vsub.s32 %v58, %v60
    %v62 = vrot.slane %v45, %v61
    %v63 = vlaneseq
    %v64 = vshrl.u32 %v63, 7
    %v65 = vsub.s32 %v58, %v64
    %v66 = vrot.slane %v46, %v65
    %vm67 = vcmask 1041409
    %v68 = vsel %vm67, %v66, %v62
    %vm69 = vcmask 64512
    %v70 = vsel %vm69, %v68, 0
    %72 = vmatprep.subr.mxu0 0.0
    %73 = vmatpush1.msra.mxu0 0.0
    %74 = vmatprep.subr.mxu0 0.0
    %75 = vmatpush1.msra.mxu0 0.0
    %76 = vmatprep.subr.mxu0 0.0
    %77 = vmatpush1.msra.mxu0 0.0
    %78 = vmatprep.subr.mxu0 0.0
    %79 = vmatpush1.msra.mxu0 0.0
    %80 = vmatprep.subr.mxu0 0.0
    %81 = vmatpush1.msra.mxu0 0.0
    %82 = vmatprep.subr.mxu0 0.0
    %83 = vmatpush1.msra.mxu0 0.0
    %84 = vmatprep.subr.mxu0 0.0
    %85 = vmatpush1.msra.mxu0 0.0
    %86 = vmatprep.subr.mxu0 0.0
    %87 = vmatpush1.msra.mxu0 0.0
    %88 = vmatprep.subr.mxu0 0.0
    %89 = vmatpush1.msra.mxu0 0.0
    %90 = vmatprep.subr.mxu0 0.0
    %91 = vmatpush1.msra.mxu0 0.0
    %92 = vmatprep.subr.mxu0 0.0
    %93 = vmatpush1.msra.mxu0 0.0
    %94 = vmatprep.subr.mxu0 0.0
    %95 = vmatpush1.msra.mxu0 0.0
    %96 = vmatprep.subr.mxu0 0.0
    %97 = vmatpush1.msra.mxu0 0.0
    %98 = vmatprep.subr.mxu0 0.0
    %99 = vmatpush1.msra.mxu0 0.0
    %100 = vmatprep.subr.mxu0 0.0
    %101 = vmatpush1.msra.mxu0 0.0
    %102 = vmatprep.subr.mxu0 0.0
    %103 = vmatpush1.msra.mxu0 %v47
    %104 = vmatprep.subr.mxu0 0.0
    %105 = vmatpush2.msra.mxu0 0.0
    %106 = vmatprep.subr.mxu0 0.0
    %107 = vmatpush2.msra.mxu0 0.0
    %108 = vmatprep.subr.mxu0 0.0
    %109 = vmatpush2.msra.mxu0 0.0
    %110 = vmatprep.subr.mxu0 0.0
    %111 = vmatpush2.msra.mxu0 0.0
    %112 = vmatprep.subr.mxu0 0.0
    %113 = vmatpush2.msra.mxu0 0.0
    %114 = vmatprep.subr.mxu0 0.0
    %115 = vmatpush2.msra.mxu0 0.0
    %116 = vmatprep.subr.mxu0 0.0
    %117 = vmatpush2.msra.mxu0 0.0
    %118 = vmatprep.subr.mxu0 0.0
    %119 = vmatpush2.msra.mxu0 0.0
    %120 = vmatprep.subr.mxu0 0.0
    %121 = vmatpush2.msra.mxu0 0.0
    %122 = vmatprep.subr.mxu0 0.0
    %123 = vmatpush2.msra.mxu0 0.0
    %124 = vmatprep.subr.mxu0 0.0
    %125 = vmatpush2.msra.mxu0 0.0
    %126 = vmatprep.subr.mxu0 0.0
    %127 = vmatpush2.msra.mxu0 0.0
    %128 = vmatprep.subr.mxu0 0.0
    %129 = vmatpush2.msra.mxu0 0.0
    %130 = vmatprep.subr.mxu0 0.0
    %131 = vmatpush2.msra.mxu0 0.0
    %132 = vmatprep.subr.mxu0 0.0
    %133 = vmatpush2.msra.mxu0 0.0
    %134 = vmatprep.subr.mxu0 0.0
    %135 = vmatpush2.msra.mxu0 0.0
    %136 = vmatprep.mubr.f32.mxu0 0.0
    %137 = vmatmul.mubr.f32.gmra.mxu0 %v70
    %v138 = vpop.f32.mrf.mxu0
    %v139 = vadd.f32 %v53, %v138
    %v140 = vpop.f32.mrf.mxu0
    %141 = vdwg.mxu0
    %v142 = vxor.u32 %v139, 2147483648
    %v143 = vmul.f32 %v142, 1.442695
    %v144 = vpow.pop %v143
    %v145 = vadd.f32 %v144, 1.0
    %v146 = vrcp.pop %v145
    %v147 = vmul.f32 1.0, %v146
    %v148 = vmul.f32 %v139, %v147
    %v149 = vld [vmem:[%s3] sm:$0x3]
    %v150 = vld [vmem:[%s4] sm:$0x1]
    %v152 = vlaneseq
    %v153 = vshrl.u32 %v152, 7
    %v154 = vsub.s32 0, %v153
    %v155 = vrot.slane %v150, %v154
    %vm157 = vcmask 15360
    %v159 = vsel %vm157, %v148, 0
    %vm161 = vcmask 1041408
    %v163 = vsel %vm161, %v149, 0
    %165 = vmatprep.subr.mxu0 0.0
    %166 = vmatpush1.msra.mxu0 0.0
    %167 = vmatprep.subr.mxu0 0.0
    %168 = vmatpush1.msra.mxu0 0.0
    %169 = vmatprep.subr.mxu0 0.0
    %170 = vmatpush1.msra.mxu0 0.0
    %171 = vmatprep.subr.mxu0 0.0
    %172 = vmatpush1.msra.mxu0 0.0
    %173 = vmatprep.subr.mxu0 0.0
    %174 = vmatpush1.msra.mxu0 0.0
    %175 = vmatprep.subr.mxu0 0.0
    %176 = vmatpush1.msra.mxu0 0.0
    %177 = vmatprep.subr.mxu0 0.0
    %178 = vmatpush1.msra.mxu0 0.0
    %179 = vmatprep.subr.mxu0 0.0
    %180 = vmatpush1.msra.mxu0 0.0
    %181 = vmatprep.subr.mxu0 0.0
    %182 = vmatpush1.msra.mxu0 0.0
    %183 = vmatprep.subr.mxu0 0.0
    %184 = vmatpush1.msra.mxu0 0.0
    %185 = vmatprep.subr.mxu0 0.0
    %186 = vmatpush1.msra.mxu0 0.0
    %187 = vmatprep.subr.mxu0 0.0
    %188 = vmatpush1.msra.mxu0 0.0
    %189 = vmatprep.subr.mxu0 0.0
    %190 = vmatpush1.msra.mxu0 0.0
    %191 = vmatprep.subr.mxu0 0.0
    %192 = vmatpush1.msra.mxu0 0.0
    %193 = vmatprep.subr.mxu0 0.0
    %194 = vmatpush1.msra.mxu0 0.0
    %195 = vmatprep.subr.mxu0 0.0
    %196 = vmatpush1.msra.mxu0 %v163
    %197 = vmatprep.subr.mxu0 0.0
    %198 = vmatpush2.msra.mxu0 0.0
    %199 = vmatprep.subr.mxu0 0.0
    %200 = vmatpush2.msra.mxu0 0.0
    %201 = vmatprep.subr.mxu0 0.0
    %202 = vmatpush2.msra.mxu0 0.0
    %203 = vmatprep.subr.mxu0 0.0
    %204 = vmatpush2.msra.mxu0 0.0
    %205 = vmatprep.subr.mxu0 0.0
    %206 = vmatpush2.msra.mxu0 0.0
    %207 = vmatprep.subr.mxu0 0.0
    %208 = vmatpush2.msra.mxu0 0.0
    %209 = vmatprep.subr.mxu0 0.0
    %210 = vmatpush2.msra.mxu0 0.0
    %211 = vmatprep.subr.mxu0 0.0
    %212 = vmatpush2.msra.mxu0 0.0
    %213 = vmatprep.subr.mxu0 0.0
    %214 = vmatpush2.msra.mxu0 0.0
    %215 = vmatprep.subr.mxu0 0.0
    %216 = vmatpush2.msra.mxu0 0.0
    %217 = vmatprep.subr.mxu0 0.0
    %218 = vmatpush2.msra.mxu0 0.0
    %219 = vmatprep.subr.mxu0 0.0
    %220 = vmatpush2.msra.mxu0 0.0
    %221 = vmatprep.subr.mxu0 0.0
    %222 = vmatpush2.msra.mxu0 0.0
    %223 = vmatprep.subr.mxu0 0.0
    %224 = vmatpush2.msra.mxu0 0.0
    %225 = vmatprep.subr.mxu0 0.0
    %226 = vmatpush2.msra.mxu0 0.0
    %227 = vmatprep.subr.mxu0 0.0
    %228 = vmatpush2.msra.mxu0 0.0
    %229 = vmatprep.mubr.f32.mxu0 0.0
    %230 = vmatmul.mubr.f32.gmra.mxu0 %v159
    %v231 = vpop.f32.mrf.mxu0
    %v232 = vadd.f32 %v155, %v231
    %v233 = vpop.f32.mrf.mxu0
    %234 = vdwg.mxu0
    %v235 = vxor.u32 %v232, 2147483648
    %v236 = vmul.f32 %v235, 1.442695
    %v237 = vpow.pop %v236
    %v238 = vadd.f32 %v237, 1.0
    %v239 = vrcp.pop %v238
    %v240 = vmul.f32 1.0, %v239
    %v241 = vlaneseq
    %v242 = vshrl.u32 %v241, 7
    %v243 = vsub.s32 0, %v242
    %v244 = vrot.slane %v240, %v243
    %246 = vbcast.lane.b32.xlu0 %v244, 256
    %v247 = vpop.permute.xlu0 %246
    %v248 = vlaneseq
    %v249 = vshrl.u32 %v248, 7
    %v250 = vsub.s32 1, %v249
    %v251 = vrot.slane %v240, %v250
    %253 = vbcast.lane.b32.xlu0 %v251, 256
    %v254 = vpop.permute.xlu0 %253
    %v255 = vmul.f32 %v35, %v247
    %v256 = vmul.f32 %v36, %v247
    %v257 = vmul.f32 %v37, %v254
    %v258 = vmul.f32 %v38, %v254
    %259 = vst [vmem:[#allocation5] sm:$0xff] %v255
    %260 = vst [vmem:[#allocation5 + $0x8] sm:$0xff] %v256
    %261 = vst [vmem:[#allocation5 + $0x10] sm:$0xff] %v257
    %262 = vst [vmem:[#allocation5 + $0x18] sm:$0xff] %v258
    // Predicated region
    $region26: #{tpu_custom_call.1} parent=1 // pred_check
      _
    $region27: #{tpu_custom_call.1} parent=1 // pred_check_branch
      %264 = sbr.rel (0) target = $region29
    $region28: #{tpu_custom_call.1} parent=1 // pred_region
      %s266 = ssub.s32 512, 512
      %267 = vsyncadd [#allocation4], %s266
      %s268 = sshll.u32 [#allocation5], 4
      %s269 = int_to_ptr.vmem [resolvable:$true] %s268
      %274 = dma.vmem_to_hbm [thread:$0]  %s269, 512, %s5, [#allocation4], 256, 256, 16
    $region29: #{tpu_custom_call.1} parent=1 // pred_fallthru
      _
    // Predicated region
    $region30: #{tpu_custom_call.1} parent=1 // pred_check
      _
    $region31: #{tpu_custom_call.1} parent=1 // pred_check_branch
      %276 = sbr.rel (0) target = $region33
    $region32: #{tpu_custom_call.1} parent=1 // pred_region
      %277 = dma.done [#allocation4], 512
    $region33: #{tpu_custom_call.1} parent=1 // pred_fallthru
      _
    %278 = vsyncpa [#allocation3], 1
    %279 = vsyncpa [#allocation4], 1

// kernel: tpu_custom_call.1
$region0: #{tpu_custom_call.1}
  #allocation0 [shape = 'u32[]', space=smem, size = 0x4, offset = 0x4, fixed_abs, tag = 'smem constant byte address 0x4 - core index']
  #allocation1 [shape = 'u32[144,128]{1,0:T(1,128)}', space=vmem, size = 0x12000, scoped, tag = 'internal scratch']
  %s0 = inlined_call_operand.hbm [shape: f32[2,8,256], index: 0, kind: input, shape index: {}]
  %s1 = inlined_call_operand.vmem [shape: f32[8,2], index: 1, kind: input, shape index: {}]
  %s2 = inlined_call_operand.vmem [shape: f32[1,2], index: 2, kind: input, shape index: {}]
  %s3 = inlined_call_operand.vmem [shape: f32[2,8], index: 3, kind: input, shape index: {}]
  %s4 = inlined_call_operand.vmem [shape: f32[1,8], index: 4, kind: input, shape index: {}]
  %s5 = inlined_call_operand.hbm [shape: f32[2,8,256], index: 5, kind: output, shape index: {}]
  %s6 = sld [smem:[#allocation0]]
  $region34: #{tpu_custom_call.1} parent=0
    _
  %s8 = ssub.s32 1, %s6
  %s9 = scalar_select 0, %s8, %s6
  $region1: #{tpu_custom_call.1} parent=0
    #allocation2 [shape = 'u8[16384]{0}', space=vmem, size = 0x4000, scoped, tag = 'input window, operand 0, single buffered']
    #allocation3 [shape = 's32[1]{0}', space=sflag, size = 0x4, scoped, tag = 'scoped memory for tpu_custom_call.1']
    #allocation4 [shape = 's32[1]{0}', space=sflag, size = 0x4, scoped, tag = 'scoped memory for tpu_custom_call.1']
    #allocation5 [shape = 'u8[16384]{0}', space=vmem, size = 0x4000, scoped, tag = 'output window, operand 0, single buffered']
    %10 = vsyncpa [#allocation3], 0
    %11 = vsyncpa [#allocation4], 0
    // Predicated region
    $region2: #{tpu_custom_call.1} parent=1 // pred_check
      _
    $region3: #{tpu_custom_call.1} parent=1 // pred_check_branch
      %13 = sbr.rel (0) target = $region5
    $region4: #{tpu_custom_call.1} parent=1 // pred_region
      %s15 = ssub.s32 512, 512
      %16 = vsyncadd [#allocation3], %s15
      %s17 = sshll.u32 [#allocation2], 4
      %s18 = int_to_ptr.vmem [resolvable:$true] %s17
      %23 = dma.hbm_to_vmem [thread:$0]  %s0, 512, %s18, [#allocation3], 256, 256, 16
    $region5: #{tpu_custom_call.1} parent=1 // pred_fallthru
      _
    // Predicated region
    $region6: #{tpu_custom_call.1} parent=1 // pred_check
      _
    $region7: #{tpu_custom_call.1} parent=1 // pred_check_branch
      %25 = sbr.rel (0) target = $region9
    $region8: #{tpu_custom_call.1} parent=1 // pred_region
      _
    $region9: #{tpu_custom_call.1} parent=1 // pred_fallthru
      _
    // Predicated region
    $region10: #{tpu_custom_call.1} parent=1 // pred_check
      _
    $region11: #{tpu_custom_call.1} parent=1 // pred_check_branch
      %27 = sbr.rel (0) target = $region13
    $region12: #{tpu_custom_call.1} parent=1 // pred_region
      _
    $region13: #{tpu_custom_call.1} parent=1 // pred_fallthru
      _
    // Predicated region
    $region14: #{tpu_custom_call.1} parent=1 // pred_check
      _
    $region15: #{tpu_custom_call.1} parent=1 // pred_check_branch
      %29 = sbr.rel (0) target = $region17
    $region16: #{tpu_custom_call.1} parent=1 // pred_region
      _
    $region17: #{tpu_custom_call.1} parent=1 // pred_fallthru
      _
    // Predicated region
    $region18: #{tpu_custom_call.1} parent=1 // pred_check
      _
    $region19: #{tpu_custom_call.1} parent=1 // pred_check_branch
      %31 = sbr.rel (0) target = $region21
    $region20: #{tpu_custom_call.1} parent=1 // pred_region
      _
    $region21: #{tpu_custom_call.1} parent=1 // pred_fallthru
      _
    // Predicated region
    $region22: #{tpu_custom_call.1} parent=1 // pred_check
      _
    $region23: #{tpu_custom_call.1} parent=1 // pred_check_branch
      %33 = sbr.rel (0) target = $region25
    $region24: #{tpu_custom_call.1} parent=1 // pred_region
      %34 = dma.done [#allocation3], 512
    $region25: #{tpu_custom_call.1} parent=1 // pred_fallthru
      _
    %v35 = vld [vmem:[#allocation2] sm:$0xff]
    %v36 = vld [vmem:[#allocation2 + $0x8] sm:$0xff]
    %v37 = vld [vmem:[#allocation2 + $0x10] sm:$0xff]
    %v38 = vld [vmem:[#allocation2 + $0x18] sm:$0xff]
    %v39 = vadd.f32 %v35, %v36
    %40 = vadd.xlane.f32.xlu0 %v39
    %v41 = vpop.xlane.xlu0 %40
    %v42 = vadd.f32 %v37, %v38
    %43 = vadd.xlane.f32.xlu0 %v42
    %v44 = vpop.xlane.xlu0 %43
    %v45 = vmul.f32 %v41, 0.00390625
    %v46 = vmul.f32 %v44, 0.00390625
    %v47 = vld [vmem:[%s1] sm:$0xff]
    %v48 = vld [vmem:[%s2] sm:$0x1]
    %v50 = vlaneseq
    %v51 = vshrl.u32 %v50, 7
    %v52 = vsub.s32 0, %v51
    %v53 = vrot.slane %v48, %v52
    %v57 = vlaneseq
    %v58 = vand.u32 %v57, 127
    %v59 = vlaneseq
    %v60 = vshrl.u32 %v59, 7
    %v61 = vsub.s32 %v58, %v60
    %v62 = vrot.slane %v45, %v61
    %v63 = vlaneseq
    %v64 = vshrl.u32 %v63, 7
    %v65 = vsub.s32 %v58, %v64
    %v66 = vrot.slane %v46, %v65
    %vm67 = vcmask 1041409
    %v68 = vsel %vm67, %v66, %v62
    %vm69 = vcmask 64512
    %v70 = vsel %vm69, %v68, 0
    %72 = vmatprep.subr.mxu0 0.0
    %73 = vmatpush1.msra.mxu0 0.0
    %74 = vmatprep.subr.mxu0 0.0
    %75 = vmatpush1.msra.mxu0 0.0
    %76 = vmatprep.subr.mxu0 0.0
    %77 = vmatpush1.msra.mxu0 0.0
    %78 = vmatprep.subr.mxu0 0.0
    %79 = vmatpush1.msra.mxu0 0.0
    %80 = vmatprep.subr.mxu0 0.0
    %81 = vmatpush1.msra.mxu0 0.0
    %82 = vmatprep.subr.mxu0 0.0
    %83 = vmatpush1.msra.mxu0 0.0
    %84 = vmatprep.subr.mxu0 0.0
    %85 = vmatpush1.msra.mxu0 0.0
    %86 = vmatprep.subr.mxu0 0.0
    %87 = vmatpush1.msra.mxu0 0.0
    %88 = vmatprep.subr.mxu0 0.0
    %89 = vmatpush1.msra.mxu0 0.0
    %90 = vmatprep.subr.mxu0 0.0
    %91 = vmatpush1.msra.mxu0 0.0
    %92 = vmatprep.subr.mxu0 0.0
    %93 = vmatpush1.msra.mxu0 0.0
    %94 = vmatprep.subr.mxu0 0.0
    %95 = vmatpush1.msra.mxu0 0.0
    %96 = vmatprep.subr.mxu0 0.0
    %97 = vmatpush1.msra.mxu0 0.0
    %98 = vmatprep.subr.mxu0 0.0
    %99 = vmatpush1.msra.mxu0 0.0
    %100 = vmatprep.subr.mxu0 0.0
    %101 = vmatpush1.msra.mxu0 0.0
    %102 = vmatprep.subr.mxu0 0.0
    %103 = vmatpush1.msra.mxu0 %v47
    %104 = vmatprep.subr.mxu0 0.0
    %105 = vmatpush2.msra.mxu0 0.0
    %106 = vmatprep.subr.mxu0 0.0
    %107 = vmatpush2.msra.mxu0 0.0
    %108 = vmatprep.subr.mxu0 0.0
    %109 = vmatpush2.msra.mxu0 0.0
    %110 = vmatprep.subr.mxu0 0.0
    %111 = vmatpush2.msra.mxu0 0.0
    %112 = vmatprep.subr.mxu0 0.0
    %113 = vmatpush2.msra.mxu0 0.0
    %114 = vmatprep.subr.mxu0 0.0
    %115 = vmatpush2.msra.mxu0 0.0
    %116 = vmatprep.subr.mxu0 0.0
    %117 = vmatpush2.msra.mxu0 0.0
    %118 = vmatprep.subr.mxu0 0.0
    %119 = vmatpush2.msra.mxu0 0.0
    %120 = vmatprep.subr.mxu0 0.0
    %121 = vmatpush2.msra.mxu0 0.0
    %122 = vmatprep.subr.mxu0 0.0
    %123 = vmatpush2.msra.mxu0 0.0
    %124 = vmatprep.subr.mxu0 0.0
    %125 = vmatpush2.msra.mxu0 0.0
    %126 = vmatprep.subr.mxu0 0.0
    %127 = vmatpush2.msra.mxu0 0.0
    %128 = vmatprep.subr.mxu0 0.0
    %129 = vmatpush2.msra.mxu0 0.0
    %130 = vmatprep.subr.mxu0 0.0
    %131 = vmatpush2.msra.mxu0 0.0
    %132 = vmatprep.subr.mxu0 0.0
    %133 = vmatpush2.msra.mxu0 0.0
    %134 = vmatprep.subr.mxu0 0.0
    %135 = vmatpush2.msra.mxu0 0.0
    %136 = vmatprep.mubr.f32.mxu0 0.0
    %137 = vmatmul.mubr.f32.gmra.mxu0 %v70
    %v138 = vpop.f32.mrf.mxu0
    %v139 = vadd.f32 %v53, %v138
    %v140 = vpop.f32.mrf.mxu0
    %141 = vdwg.mxu0
    %v142 = vxor.u32 %v139, 2147483648
    %v143 = vmul.f32 %v142, 1.442695
    %v144 = vpow.pop %v143
    %v145 = vadd.f32 %v144, 1.0
    %v146 = vrcp.pop %v145
    %v147 = vmul.f32 1.0, %v146
    %v148 = vmul.f32 %v139, %v147
    %v149 = vld [vmem:[%s3] sm:$0x3]
    %v150 = vld [vmem:[%s4] sm:$0x1]
    %v152 = vlaneseq
    %v153 = vshrl.u32 %v152, 7
    %v154 = vsub.s32 0, %v153
    %v155 = vrot.slane %v150, %v154
    %vm157 = vcmask 15360
    %v159 = vsel %vm157, %v148, 0
    %vm161 = vcmask 1041408
    %v163 = vsel %vm161, %v149, 0
    %165 = vmatprep.subr.mxu0 0.0
    %166 = vmatpush1.msra.mxu0 0.0
    %167 = vmatprep.subr.mxu0 0.0
    %168 = vmatpush1.msra.mxu0 0.0
    %169 = vmatprep.subr.mxu0 0.0
    %170 = vmatpush1.msra.mxu0 0.0
    %171 = vmatprep.subr.mxu0 0.0
    %172 = vmatpush1.msra.mxu0 0.0
    %173 = vmatprep.subr.mxu0 0.0
    %174 = vmatpush1.msra.mxu0 0.0
    %175 = vmatprep.subr.mxu0 0.0
    %176 = vmatpush1.msra.mxu0 0.0
    %177 = vmatprep.subr.mxu0 0.0
    %178 = vmatpush1.msra.mxu0 0.0
    %179 = vmatprep.subr.mxu0 0.0
    %180 = vmatpush1.msra.mxu0 0.0
    %181 = vmatprep.subr.mxu0 0.0
    %182 = vmatpush1.msra.mxu0 0.0
    %183 = vmatprep.subr.mxu0 0.0
    %184 = vmatpush1.msra.mxu0 0.0
    %185 = vmatprep.subr.mxu0 0.0
    %186 = vmatpush1.msra.mxu0 0.0
    %187 = vmatprep.subr.mxu0 0.0
    %188 = vmatpush1.msra.mxu0 0.0
    %189 = vmatprep.subr.mxu0 0.0
    %190 = vmatpush1.msra.mxu0 0.0
    %191 = vmatprep.subr.mxu0 0.0
    %192 = vmatpush1.msra.mxu0 0.0
    %193 = vmatprep.subr.mxu0 0.0
    %194 = vmatpush1.msra.mxu0 0.0
    %195 = vmatprep.subr.mxu0 0.0
    %196 = vmatpush1.msra.mxu0 %v163
    %197 = vmatprep.subr.mxu0 0.0
    %198 = vmatpush2.msra.mxu0 0.0
    %199 = vmatprep.subr.mxu0 0.0
    %200 = vmatpush2.msra.mxu0 0.0
    %201 = vmatprep.subr.mxu0 0.0
    %202 = vmatpush2.msra.mxu0 0.0
    %203 = vmatprep.subr.mxu0 0.0
    %204 = vmatpush2.msra.mxu0 0.0
    %205 = vmatprep.subr.mxu0 0.0
    %206 = vmatpush2.msra.mxu0 0.0
    %207 = vmatprep.subr.mxu0 0.0
    %208 = vmatpush2.msra.mxu0 0.0
    %209 = vmatprep.subr.mxu0 0.0
    %210 = vmatpush2.msra.mxu0 0.0
    %211 = vmatprep.subr.mxu0 0.0
    %212 = vmatpush2.msra.mxu0 0.0
    %213 = vmatprep.subr.mxu0 0.0
    %214 = vmatpush2.msra.mxu0 0.0
    %215 = vmatprep.subr.mxu0 0.0
    %216 = vmatpush2.msra.mxu0 0.0
    %217 = vmatprep.subr.mxu0 0.0
    %218 = vmatpush2.msra.mxu0 0.0
    %219 = vmatprep.subr.mxu0 0.0
    %220 = vmatpush2.msra.mxu0 0.0
    %221 = vmatprep.subr.mxu0 0.0
    %222 = vmatpush2.msra.mxu0 0.0
    %223 = vmatprep.subr.mxu0 0.0
    %224 = vmatpush2.msra.mxu0 0.0
    %225 = vmatprep.subr.mxu0 0.0
    %226 = vmatpush2.msra.mxu0 0.0
    %227 = vmatprep.subr.mxu0 0.0
    %228 = vmatpush2.msra.mxu0 0.0
    %229 = vmatprep.mubr.f32.mxu0 0.0
    %230 = vmatmul.mubr.f32.gmra.mxu0 %v159
    %v231 = vpop.f32.mrf.mxu0
    %v232 = vadd.f32 %v155, %v231
    %v233 = vpop.f32.mrf.mxu0
    %234 = vdwg.mxu0
    %v235 = vxor.u32 %v232, 2147483648
    %v236 = vmul.f32 %v235, 1.442695
    %v237 = vpow.pop %v236
    %v238 = vadd.f32 %v237, 1.0
    %v239 = vrcp.pop %v238
    %v240 = vmul.f32 1.0, %v239
    %v241 = vlaneseq
    %v242 = vshrl.u32 %v241, 7
    %v243 = vsub.s32 0, %v242
    %v244 = vrot.slane %v240, %v243
    %246 = vbcast.lane.b32.xlu0 %v244, 256
    %v247 = vpop.permute.xlu0 %246
    %v248 = vlaneseq
    %v249 = vshrl.u32 %v248, 7
    %v250 = vsub.s32 1, %v249
    %v251 = vrot.slane %v240, %v250
    %253 = vbcast.lane.b32.xlu0 %v251, 256
    %v254 = vpop.permute.xlu0 %253
    %v255 = vmul.f32 %v35, %v247
    %v256 = vmul.f32 %v36, %v247
    %v257 = vmul.f32 %v37, %v254
    %v258 = vmul.f32 %v38, %v254
    %259 = vst [vmem:[#allocation5] sm:$0xff] %v255
    %260 = vst [vmem:[#allocation5 + $0x8] sm:$0xff] %v256
    %261 = vst [vmem:[#allocation5 + $0x10] sm:$0xff] %v257
    %262 = vst [vmem:[#allocation5 + $0x18] sm:$0xff] %v258
    // Predicated region
    $region26: #{tpu_custom_call.1} parent=1 // pred_check
      _
    $region27: #{tpu_custom_call.1} parent=1 // pred_check_branch
      %264 = sbr.rel (0) target = $region29
    $region28: #{tpu_custom_call.1} parent=1 // pred_region
      %s266 = ssub.s32 512, 512
      %267 = vsyncadd [#allocation4], %s266
      %s268 = sshll.u32 [#allocation5], 4
      %s269 = int_to_ptr.vmem [resolvable:$true] %s268
      %274 = dma.vmem_to_hbm [thread:$0]  %s269, 512, %s5, [#allocation4], 256, 256, 16
    $region29: #{tpu_custom_call.1} parent=1 // pred_fallthru
      _
    // Predicated region
    $region30: #{tpu_custom_call.1} parent=1 // pred_check
      _
    $region31: #{tpu_custom_call.1} parent=1 // pred_check_branch
      %276 = sbr.rel (0) target = $region33
    $region32: #{tpu_custom_call.1} parent=1 // pred_region
      %277 = dma.done [#allocation4], 512
    $region33: #{tpu_custom_call.1} parent=1 // pred_fallthru
      _
    %278 = vsyncpa [#allocation3], 1
    %279 = vsyncpa [#allocation4], 1

</llo_original>
